<compile_context>
chip_gen: v6e
topology: v6e:2x2x1
jax: 0.10.0
libtpu: 0.0.40
codegen_flags: <defaults>
</compile_context>

<pallas_src>
import jax
import jax.numpy as jnp
from jax.experimental import pallas as pl
from jax.experimental.pallas import tpu as pltpu


def node_features_kernel(ux_ref, vx_ref, gate_ref, o_ref, sum_gv_ref, sum_g_ref):
    # ux_ref:   (1, TI, TH)     precomputed U-projection rows for this i-tile
    # vx_ref:   (1, TJ, TH)     precomputed V-projection rows for this j-tile
    # gate_ref: (1, TI, TJ, TH) edge-gate tile (f32 or bf16; upcast here)
    # o_ref:    (1, TI, TH)
    # sum_gv_ref / sum_g_ref: (TI, TH) f32 scratch accumulators over the j axis
    j = pl.program_id(3)

    @pl.when(j == 0)
    def _init():
        sum_gv_ref[...] = jnp.zeros_like(sum_gv_ref)
        sum_g_ref[...] = jnp.zeros_like(sum_g_ref)

    gate = gate_ref[0].astype(jnp.float32)            # (TI, TJ, TH)
    vx = vx_ref[0].astype(jnp.float32)                # (TJ, TH)

    # Fused gate-multiply + reduction over the j tile, accumulated in VMEM.
    sum_gv_ref[...] += jnp.sum(gate * vx[None, :, :], axis=1)   # (TI, TH)
    sum_g_ref[...] += jnp.sum(gate, axis=1)                     # (TI, TH)

    @pl.when(j == pl.num_programs(3) - 1)
    def _finalize():
        ux = ux_ref[0].astype(jnp.float32)
        o_ref[0] = (ux + sum_gv_ref[...] / (1e-20 + sum_g_ref[...])).astype(o_ref.dtype)


def _pick_tile(n: int, cap: int, pref: int) -> int:
    """Largest divisor of n <= cap, preferring multiples of `pref` (8 f32 / 16 bf16)."""
    cap = max(1, min(n, cap))
    best_any = None
    for d in range(cap, 0, -1):
        if n % d:
            continue
        if d % pref == 0:
            return d
        if best_any is None:
            best_any = d
    d = best_any if best_any is not None else n
    # (8,128) tiling rule: second-minor block dims must be a multiple of 8 or the full dim.
    if d % 8 != 0 and d != n:
        return n
    return d


def node_features(x, edge_gate, U_w, U_b, V_w, V_b, *,
                  tile_i=None, tile_j=None, tile_h=None):
    """x: (B, N, H), edge_gate: (B, N, N, H) -> (B, N, H). 'mean' aggregation."""
    B, N, H = x.shape
    assert edge_gate.shape == (B, N, N, H)

    # ---- Hoisted projections (plain XLA, done once; kernel is pure MAC stream) ----
    f32 = jnp.float32
    U_wT = jnp.asarray(U_w).T.astype(f32)
    V_wT = jnp.asarray(V_w).T.astype(f32)
    Ux = jnp.dot(x.astype(f32), U_wT) + jnp.asarray(U_b).astype(f32)   # (B, N, H)
    Vx = jnp.dot(x.astype(f32), V_wT) + jnp.asarray(V_b).astype(f32)   # (B, N, H)

    gate_itemsize = jnp.dtype(edge_gate.dtype).itemsize

    # ---- Generation-aware VMEM budget (v7x: 64 MiB/TC, v5e/v6e: 128 MiB) ----
    try:
        vmem_cap = int(getattr(pltpu.get_tpu_info(), "vmem_capacity_bytes", 64 << 20))
    except Exception:
        vmem_cap = 64 << 20
    gate_tile_budget = (8 << 20) if vmem_cap >= (100 << 20) else (4 << 20)

    # ---- Feature (lane) tiling: only split H when it is a large multiple of 128 ----
    if tile_h is not None:
        th = int(tile_h)
    elif H % 128 == 0 and H > 256:
        th = 256 if H % 256 == 0 else 128
    else:
        th = H
    assert H % th == 0, "tile_h must divide hidden_dim"

    # ---- Node tiling from the byte budget; grow tj (reduction axis) first ----
    pref = 8 if gate_itemsize >= 4 else 16
    elem_budget = max(64, gate_tile_budget // (th * gate_itemsize))
    tj = int(tile_j) if tile_j is not None else _pick_tile(N, max(8, elem_budget // 8), pref)
    ti = int(tile_i) if tile_i is not None else _pick_tile(N, max(8, elem_budget // tj), pref)
    assert N % ti == 0 and N % tj == 0, "tile sizes must divide num_nodes"

    # ---- VMEM limit: what we actually need, clamped below physical capacity ----
    gate_tile_bytes = ti * tj * th * gate_itemsize
    proj_tile_bytes = (ti + tj) * th * 4
    out_tile_bytes = ti * th * jnp.dtype(x.dtype).itemsize
    scratch_bytes = 2 * ti * th * 4
    need = 2 * (gate_tile_bytes + proj_tile_bytes + out_tile_bytes) + scratch_bytes + (4 << 20)
    vmem_limit = int(min(max(need, 32 << 20), vmem_cap - (8 << 20)))

    grid = (B, N // ti, H // th, N // tj)

    out = pl.pallas_call(
        node_features_kernel,
        out_shape=jax.ShapeDtypeStruct((B, N, H), x.dtype),
        grid_spec=pltpu.PrefetchScalarGridSpec(
            num_scalar_prefetch=0,
            grid=grid,
            in_specs=[
                pl.BlockSpec((1, ti, th), lambda b, i, h, j: (b, i, h)),         # Ux (i-tile)
                pl.BlockSpec((1, tj, th), lambda b, i, h, j: (b, j, h)),         # Vx (j-tile)
                pl.BlockSpec((1, ti, tj, th), lambda b, i, h, j: (b, i, j, h)),  # edge_gate tile
            ],
            out_specs=pl.BlockSpec((1, ti, th), lambda b, i, h, j: (b, i, h)),
            scratch_shapes=[
                pltpu.VMEM((ti, th), jnp.float32),   # sum_j gate * Vx
                pltpu.VMEM((ti, th), jnp.float32),   # sum_j gate
            ],
        ),
        compiler_params=pltpu.CompilerParams(
            dimension_semantics=("parallel", "parallel", "parallel", "arbitrary"),
            vmem_limit_bytes=vmem_limit,
        ),
    )(Ux, Vx, edge_gate)
    return out


def node_features_ref(x, edge_gate, U_w, U_b, V_w, V_b):
    """Pure-JAX reference (mirrors the PyTorch forward, 'mean' aggregation)."""
    Ux = x @ U_w.T + U_b
    Vx = x @ V_w.T + V_b
    gate = edge_gate.astype(jnp.float32)
    gateVx = gate * Vx[:, None, :, :]
    return Ux + jnp.sum(gateVx, axis=2) / (1e-20 + jnp.sum(gate, axis=2))


if __name__ == "__main__":
    B, N, H = 2, 16, 32          # small demo; tiles exercise the (b, i, h, j) grid
    key = jax.random.PRNGKey(0)
    k1, k2, k3, k4, k5, k6 = jax.random.split(key, 6)

    x = jax.random.normal(k1, (B, N, H), dtype=jnp.float32)
    # gates in (0, 1), like sigmoid outputs (pass bf16 here in production to
    # halve HBM traffic on the dominant stream; kernel upcasts internally)
    edge_gate = jax.nn.sigmoid(jax.random.normal(k2, (B, N, N, H), dtype=jnp.float32))

    # PyTorch-style Linear params: weight (out, in), bias (out,)
    bound = 1.0 / (H ** 0.5)
    U_w = jax.random.uniform(k3, (H, H), jnp.float32, -bound, bound)
    U_b = jax.random.uniform(k4, (H,), jnp.float32, -bound, bound)
    V_w = jax.random.uniform(k5, (H, H), jnp.float32, -bound, bound)
    V_b = jax.random.uniform(k6, (H,), jnp.float32, -bound, bound)

    out = node_features(x, edge_gate, U_w, U_b, V_w, V_b, tile_i=8, tile_j=8)
    out = jax.block_until_ready(out)

    ref = node_features_ref(x, edge_gate, U_w, U_b, V_w, V_b)
    assert out.shape == (B, N, H)
    assert jnp.allclose(out, ref, atol=1e-5, rtol=1e-5), "mismatch vs reference"

    print("KERNEL_OK")
</pallas_src>

<mosaic_0001>
module attributes {stable_mosaic.version = 11 : i64} {
  func.func @node_features_kernel(%arg0: i32, %arg1: i32, %arg2: i32, %arg3: i32, %arg4: memref<1x8x32xf32, #tpu.memory_space<vmem>>, %arg5: memref<1x8x32xf32, #tpu.memory_space<vmem>>, %arg6: memref<1x8x8x32xf32, #tpu.memory_space<vmem>>, %arg7: memref<1x8x32xf32, #tpu.memory_space<vmem>>, %arg8: memref<8x32xf32, #tpu.memory_space<vmem>>, %arg9: memref<8x32xf32, #tpu.memory_space<vmem>>) attributes {dimension_semantics = [#tpu.dimension_semantics<parallel>, #tpu.dimension_semantics<parallel>, #tpu.dimension_semantics<parallel>, #tpu.dimension_semantics<arbitrary>], iteration_bounds = array<i64: 2, 2, 1, 2>, scalar_prefetch = 0 : i64, scratch_operands = 2 : i64, tpu.core_type = #tpu.core_type<tc>, window_params = [{transform_indices = @transform_0, window_bounds = array<i64: 1, 8, 32>}, {transform_indices = @transform_1, window_bounds = array<i64: 1, 8, 32>}, {transform_indices = @transform_2, window_bounds = array<i64: 1, 8, 8, 32>}, {transform_indices = @transform_3, window_bounds = array<i64: 1, 8, 32>}]} {
    %c0_i32 = arith.constant 0 : i32
    %0 = arith.cmpi eq, %arg3, %c0_i32 : i32
    %1 = arith.extui %0 : i1 to i32
    %c0_i32_0 = arith.constant 0 : i32
    %2 = arith.cmpi ne, %1, %c0_i32_0 : i32
    scf.if %2 {
      %cst_17 = arith.constant 0.000000e+00 : f32
      %21 = vector.broadcast %cst_17 : f32 to vector<8x32xf32>
      %c0_18 = arith.constant 0 : index
      %c0_19 = arith.constant 0 : index
      %22 = vector.load %arg8[%c0_18, %c0_19] : memref<8x32xf32, #tpu.memory_space<vmem>>, vector<8x32xf32>
      tpu.vector_store %arg8[%c0_18, %c0_19], %21 {strides = array<i32>} : memref<8x32xf32, #tpu.memory_space<vmem>>, vector<8x32xf32>,
      %cst_20 = arith.constant 0.000000e+00 : f32
      %23 = vector.broadcast %cst_20 : f32 to vector<8x32xf32>
      %c0_21 = arith.constant 0 : index
      %c0_22 = arith.constant 0 : index
      %24 = vector.load %arg9[%c0_21, %c0_22] : memref<8x32xf32, #tpu.memory_space<vmem>>, vector<8x32xf32>
      tpu.vector_store %arg9[%c0_21, %c0_22], %23 {strides = array<i32>} : memref<8x32xf32, #tpu.memory_space<vmem>>, vector<8x32xf32>,
    } else {
    }
    %c0 = arith.constant 0 : index
    %c0_1 = arith.constant 0 : index
    %c0_2 = arith.constant 0 : index
    %c0_3 = arith.constant 0 : index
    %3 = vector.load %arg6[%c0, %c0_1, %c0_2, %c0_3] : memref<1x8x8x32xf32, #tpu.memory_space<vmem>>, vector<1x8x8x32xf32>
    %4 = vector.shape_cast %3 : vector<1x8x8x32xf32> to vector<8x8x32xf32>
    %c0_4 = arith.constant 0 : index
    %c0_5 = arith.constant 0 : index
    %c0_6 = arith.constant 0 : index
    %5 = vector.load %arg5[%c0_4, %c0_5, %c0_6] : memref<1x8x32xf32, #tpu.memory_space<vmem>>, vector<1x8x32xf32>
    %6 = vector.shape_cast %5 : vector<1x8x32xf32> to vector<8x32xf32>
    %c0_7 = arith.constant 0 : index
    %c0_8 = arith.constant 0 : index
    %7 = vector.load %arg8[%c0_7, %c0_8] : memref<8x32xf32, #tpu.memory_space<vmem>>, vector<8x32xf32>
    %8 = vector.shape_cast %6 : vector<8x32xf32> to vector<1x8x32xf32>
    %9 = vector.broadcast %8 : vector<1x8x32xf32> to vector<8x8x32xf32>
    %10 = arith.mulf %4, %9 : vector<8x8x32xf32>
    %cst = arith.constant dense<0.000000e+00> : vector<8x32xf32>
    %11 = vector.multi_reduction <add>, %10, %cst [1] : vector<8x8x32xf32> to vector<8x32xf32>
    %12 = arith.addf %7, %11 : vector<8x32xf32>
    %c0_9 = arith.constant 0 : index
    %c0_10 = arith.constant 0 : index
    %13 = vector.load %arg8[%c0_9, %c0_10] : memref<8x32xf32, #tpu.memory_space<vmem>>, vector<8x32xf32>
    tpu.vector_store %arg8[%c0_9, %c0_10], %12 {strides = array<i32>} : memref<8x32xf32, #tpu.memory_space<vmem>>, vector<8x32xf32>,
    %c0_11 = arith.constant 0 : index
    %c0_12 = arith.constant 0 : index
    %14 = vector.load %arg9[%c0_11, %c0_12] : memref<8x32xf32, #tpu.memory_space<vmem>>, vector<8x32xf32>
    %cst_13 = arith.constant dense<0.000000e+00> : vector<8x32xf32>
    %15 = vector.multi_reduction <add>, %4, %cst_13 [1] : vector<8x8x32xf32> to vector<8x32xf32>
    %16 = arith.addf %14, %15 : vector<8x32xf32>
    %c0_14 = arith.constant 0 : index
    %c0_15 = arith.constant 0 : index
    %17 = vector.load %arg9[%c0_14, %c0_15] : memref<8x32xf32, #tpu.memory_space<vmem>>, vector<8x32xf32>
    tpu.vector_store %arg9[%c0_14, %c0_15], %16 {strides = array<i32>} : memref<8x32xf32, #tpu.memory_space<vmem>>, vector<8x32xf32>,
    %c1_i32 = arith.constant 1 : i32
    %18 = arith.cmpi eq, %arg3, %c1_i32 : i32
    %19 = arith.extui %18 : i1 to i32
    %c0_i32_16 = arith.constant 0 : i32
    %20 = arith.cmpi ne, %19, %c0_i32_16 : i32
    scf.if %20 {
      %c0_17 = arith.constant 0 : index
      %c0_18 = arith.constant 0 : index
      %c0_19 = arith.constant 0 : index
      %21 = vector.load %arg4[%c0_17, %c0_18, %c0_19] : memref<1x8x32xf32, #tpu.memory_space<vmem>>, vector<1x8x32xf32>
      %22 = vector.shape_cast %21 : vector<1x8x32xf32> to vector<8x32xf32>
      %c0_20 = arith.constant 0 : index
      %c0_21 = arith.constant 0 : index
      %23 = vector.load %arg8[%c0_20, %c0_21] : memref<8x32xf32, #tpu.memory_space<vmem>>, vector<8x32xf32>
      %c0_22 = arith.constant 0 : index
      %c0_23 = arith.constant 0 : index
      %24 = vector.load %arg9[%c0_22, %c0_23] : memref<8x32xf32, #tpu.memory_space<vmem>>, vector<8x32xf32>
      %cst_24 = arith.constant 9.99999968E-21 : f32
      %25 = vector.broadcast %cst_24 : f32 to vector<8x32xf32>
      %26 = arith.addf %25, %24 : vector<8x32xf32>
      %27 = arith.divf %23, %26 : vector<8x32xf32>
      %28 = arith.addf %22, %27 : vector<8x32xf32>
      %c0_25 = arith.constant 0 : index
      %c0_26 = arith.constant 0 : index
      %c0_27 = arith.constant 0 : index
      %29 = vector.load %arg7[%c0_25, %c0_26, %c0_27] : memref<1x8x32xf32, #tpu.memory_space<vmem>>, vector<1x8x32xf32>
      %30 = vector.shape_cast %29 : vector<1x8x32xf32> to vector<8x32xf32>
      %31 = vector.shape_cast %28 : vector<8x32xf32> to vector<1x8x32xf32>
      tpu.vector_store %arg7[%c0_25, %c0_26, %c0_27], %31 {strides = array<i32>} : memref<1x8x32xf32, #tpu.memory_space<vmem>>, vector<1x8x32xf32>,
    } else {
    }
    return
  }
  func.func @transform_0(%arg0: i32, %arg1: i32, %arg2: i32, %arg3: i32) -> (i32, i32, i32) {
    %c0_i32 = arith.constant 0 : i32
    return %arg0, %arg1, %arg2 : i32, i32, i32
  }
  func.func @transform_1(%arg0: i32, %arg1: i32, %arg2: i32, %arg3: i32) -> (i32, i32, i32) {
    %c0_i32 = arith.constant 0 : i32
    return %arg0, %arg3, %arg2 : i32, i32, i32
  }
  func.func @transform_2(%arg0: i32, %arg1: i32, %arg2: i32, %arg3: i32) -> (i32, i32, i32, i32) {
    %c0_i32 = arith.constant 0 : i32
    return %arg0, %arg1, %arg3, %arg2 : i32, i32, i32, i32
  }
  func.func @transform_3(%arg0: i32, %arg1: i32, %arg2: i32, %arg3: i32) -> (i32, i32, i32) {
    %c0_i32 = arith.constant 0 : i32
    return %arg0, %arg1, %arg2 : i32, i32, i32
  }
}

</mosaic_0001>

<llo_original>
// kernel: tpu_custom_call.1
$region0: #{tpu_custom_call.1}
  #allocation0 [shape = 'u32[]', space=smem, size = 0x4, offset = 0x4, fixed_abs, tag = 'smem constant byte address 0x4 - core index']
  #allocation1 [shape = 'u32[144,128]{1,0:T(1,128)}', space=vmem, size = 0x12000, scoped, tag = 'internal scratch']
  #allocation2 [shape = 'f32[8,32]{1,0:T(8,128)}', space=vmem, size = 0x1000, scoped, tag = 'scratch operand']
  #allocation3 [shape = 'f32[8,32]{1,0:T(8,128)}', space=vmem, size = 0x1000, scoped, tag = 'scratch operand']
  %s0 = inlined_call_operand.hbm [shape: f32[2,16,32], index: 0, kind: input, shape index: {}]
  %s1 = inlined_call_operand.hbm [shape: f32[2,16,32], index: 1, kind: input, shape index: {}]
  %s2 = inlined_call_operand.hbm [shape: f32[2,16,16,32], index: 2, kind: input, shape index: {}]
  %s3 = inlined_call_operand.hbm [shape: f32[2,16,32], index: 3, kind: output, shape index: {}]
  %s4 = sld [smem:[#allocation0]]
  $region65: #{tpu_custom_call.1} parent=0
    _
  %s6 = ssub.s32 1, %s4
  %s7 = scalar_select 0, %s6, %s4
  $region1: #{tpu_custom_call.1} parent=0
    #allocation4 [shape = 'u8[8192]{0}', space=vmem, size = 0x2000, scoped, tag = 'input window, operand 0']
    #allocation5 [shape = 's32[2]{0}', space=sflag, size = 0x8, scoped, tag = 'scoped memory for tpu_custom_call.1']
    #allocation6 [shape = 's32[2]{0}', space=sflag, size = 0x8, scoped, tag = 'scoped memory for tpu_custom_call.1']
    #allocation7 [shape = 'u8[8192]{0}', space=vmem, size = 0x2000, scoped, tag = 'input window, operand 1']
    #allocation8 [shape = 's32[2]{0}', space=sflag, size = 0x8, scoped, tag = 'scoped memory for tpu_custom_call.1']
    #allocation9 [shape = 'u8[65536]{0}', space=vmem, size = 0x10000, scoped, tag = 'input window, operand 2']
    #allocation10 [shape = 'u8[8192]{0}', space=vmem, size = 0x2000, scoped, tag = 'output window, operand 0']
    %8 = vsyncpa [#allocation5], 0
    %s9 = scalar_lea.sflag [#allocation5], 1
    %10 = vsyncpa %s9, 0
    %11 = vsyncpa [#allocation8], 0
    %s12 = scalar_lea.sflag [#allocation8], 1
    %13 = vsyncpa %s12, 0
    %14 = vsyncpa [#allocation6], 0
    %s15 = scalar_lea.sflag [#allocation6], 1
    %16 = vsyncpa %s15, 0
    loop: start=0, step=1, limit=10
    $region2: #{tpu_custom_call.1} parent=1 // loop_pre_header
      _
    $region3: #{tpu_custom_call.1} parent=1 // loop_header
      %s18 = sphi 0, %s22
      %p19 = scmp.ge.s32.totalorder %s18, 10
      %s25 = sphi 0, %s51
      %s26 = sphi 0, %s47
      %s27 = sphi 0, %s43
      %s28 = sphi 0, %s39
      %s29 = sphi 0, %s25
      %s30 = sphi 0, %s26
      %s31 = sphi 0, %s27
      %s32 = sphi 0, %s28
      %s33 = sphi 0, %s29
      %s34 = sphi 0, %s30
      %s35 = sphi 0, %s31
      %s36 = sphi 0, %s32
      %s58 = sphi 0, %s60
      %s61 = sphi 0, %s58
      %s62 = sphi 0, %s61
      %s78 = sphi 0, %s62
      %s88 = sphi 0, %s90
      %s91 = sphi 0, %s88
      %s92 = sphi 0, %s91
      %s108 = sphi 0, %s92
      %s120 = sphi 0, %s122
      %s123 = sphi 0, %s120
      %s124 = sphi 0, %s123
      %s140 = sphi 0, %s124
      %s150 = sphi 0, %s152
      %s153 = sphi 0, %s150
      %s154 = sphi 0, %s153
      %s170 = sphi 0, %s154
    $region4: #{tpu_custom_call.1} parent=1 // loop_header_branch
      %21 = sbr.rel (%p19) target = $region8
    $region5: #{tpu_custom_call.1} parent=1 // loop_body
      %s23 = ssub.s32 %s18, 1
      %s24 = ssub.s32 %s18, 2
      %s37 = sadd.s32 1, %s28
      %p38 = scmp.ge.s32.totalorder %s37, 2
      %s39 = scalar_select %p38, 0, %s37
      %s40 = sadd.s32 1, %s27
      %s41 = scalar_select %p38, %s40, %s27
      %p42 = scmp.ge.s32.totalorder %s41, 1
      %s43 = scalar_select %p42, 0, %s41
      %s44 = sadd.s32 1, %s26
      %s45 = scalar_select %p42, %s44, %s26
      %p46 = scmp.ge.s32.totalorder %s45, 2
      %s47 = scalar_select %p46, 0, %s45
      %s48 = sadd.s32 1, %s25
      %s49 = scalar_select %p46, %s48, %s25
      %p50 = scmp.ge.s32.totalorder %s49, 2
      %s51 = scalar_select %p50, 0, %s49
      %s52 = ssub.s32 %s25, %s51
      %s53 = ssub.s32 %s26, %s47
      %s54 = sor.u32 %s52, %s53
      %s55 = ssub.s32 %s27, %s43
      %s56 = sor.u32 %s54, %s55
      %p57 = scmp.eq.s32.totalorder %s56, 0
      %s59 = sadd.s32 %s58, 1
      %s60 = scalar_select %p57, %s58, %s59
      %p63 = pneg %p57
      %p64 = scmp.eq.s32.totalorder %s18, 7
      %p65 = por %p63, %p64
      %p66 = scmp.ne.s32.totalorder %s58, %s61
      %p67 = scmp.eq.s32.totalorder %s18, 0
      %p68 = por %p66, %p67
      %p69 = scmp.ne.s32.totalorder %s58, %s61
      %p70 = scmp.eq.s32.totalorder %s23, 7
      %p71 = por %p69, %p70
      %p72 = scmp.ne.s32.totalorder %s61, %s62
      %p73 = scmp.eq.s32.totalorder %s23, 0
      %p74 = por %p72, %p73
      %p75 = scmp.ne.s32.totalorder %s61, %s62
      %p76 = scmp.eq.s32.totalorder %s24, 7
      %p77 = por %p75, %p76
      %p79 = scmp.ne.s32.totalorder %s62, %s78
      %p80 = scmp.eq.s32.totalorder %s24, 0
      %p81 = por %p79, %p80
      %s82 = ssub.s32 %s25, %s51
      %s83 = ssub.s32 %s28, %s39
      %s84 = sor.u32 %s82, %s83
      %s85 = ssub.s32 %s27, %s43
      %s86 = sor.u32 %s84, %s85
      %p87 = scmp.eq.s32.totalorder %s86, 0
      %s89 = sadd.s32 %s88, 1
      %s90 = scalar_select %p87, %s88, %s89
      %p93 = pneg %p87
      %p94 = scmp.eq.s32.totalorder %s18, 7
      %p95 = por %p93, %p94
      %p96 = scmp.ne.s32.totalorder %s88, %s91
      %p97 = scmp.eq.s32.totalorder %s18, 0
      %p98 = por %p96, %p97
      %p99 = scmp.ne.s32.totalorder %s88, %s91
      %p100 = scmp.eq.s32.totalorder %s23, 7
      %p101 = por %p99, %p100
      %p102 = scmp.ne.s32.totalorder %s91, %s92
      %p103 = scmp.eq.s32.totalorder %s23, 0
      %p104 = por %p102, %p103
      %p105 = scmp.ne.s32.totalorder %s91, %s92
      %p106 = scmp.eq.s32.totalorder %s24, 7
      %p107 = por %p105, %p106
      %p109 = scmp.ne.s32.totalorder %s92, %s108
      %p110 = scmp.eq.s32.totalorder %s24, 0
      %p111 = por %p109, %p110
      %s112 = ssub.s32 %s25, %s51
      %s113 = ssub.s32 %s26, %s47
      %s114 = sor.u32 %s112, %s113
      %s115 = ssub.s32 %s28, %s39
      %s116 = sor.u32 %s114, %s115
      %s117 = ssub.s32 %s27, %s43
      %s118 = sor.u32 %s116, %s117
      %p119 = scmp.eq.s32.totalorder %s118, 0
      %s121 = sadd.s32 %s120, 1
      %s122 = scalar_select %p119, %s120, %s121
      %p125 = pneg %p119
      %p126 = scmp.eq.s32.totalorder %s18, 7
      %p127 = por %p125, %p126
      %p128 = scmp.ne.s32.totalorder %s120, %s123
      %p129 = scmp.eq.s32.totalorder %s18, 0
      %p130 = por %p128, %p129
      %p131 = scmp.ne.s32.totalorder %s120, %s123
      %p132 = scmp.eq.s32.totalorder %s23, 7
      %p133 = por %p131, %p132
      %p134 = scmp.ne.s32.totalorder %s123, %s124
      %p135 = scmp.eq.s32.totalorder %s23, 0
      %p136 = por %p134, %p135
      %p137 = scmp.ne.s32.totalorder %s123, %s124
      %p138 = scmp.eq.s32.totalorder %s24, 7
      %p139 = por %p137, %p138
      %p141 = scmp.ne.s32.totalorder %s124, %s140
      %p142 = scmp.eq.s32.totalorder %s24, 0
      %p143 = por %p141, %p142
      %s144 = ssub.s32 %s25, %s51
      %s145 = ssub.s32 %s26, %s47
      %s146 = sor.u32 %s144, %s145
      %s147 = ssub.s32 %s27, %s43
      %s148 = sor.u32 %s146, %s147
      %p149 = scmp.eq.s32.totalorder %s148, 0
      %s151 = sadd.s32 %s150, 1
      %s152 = scalar_select %p149, %s150, %s151
      %p155 = pneg %p149
      %p156 = scmp.eq.s32.totalorder %s18, 7
      %p157 = por %p155, %p156
      %p158 = scmp.ne.s32.totalorder %s150, %s153
      %p159 = scmp.eq.s32.totalorder %s18, 0
      %p160 = por %p158, %p159
      %p161 = scmp.ne.s32.totalorder %s150, %s153
      %p162 = scmp.eq.s32.totalorder %s23, 7
      %p163 = por %p161, %p162
      %p164 = scmp.ne.s32.totalorder %s153, %s154
      %p165 = scmp.eq.s32.totalorder %s23, 0
      %p166 = por %p164, %p165
      %p167 = scmp.ne.s32.totalorder %s153, %s154
      %p168 = scmp.eq.s32.totalorder %s24, 7
      %p169 = por %p167, %p168
      %p171 = scmp.ne.s32.totalorder %s154, %s170
      %p172 = scmp.eq.s32.totalorder %s24, 0
      %p173 = por %p171, %p172
      %p174 = scmp.le.s32.totalorder 1, %s18
      %p175 = scmp.lt.s32.totalorder %s18, 9
      %p176 = pnand %p174, %p175
      %p177 = pneg %p176
      // Predicated region
      $region9: #{tpu_custom_call.1} parent=5 // pred_check
        _
      $region10: #{tpu_custom_call.1} parent=5 // pred_check_branch
        %179 = sbr.rel (%p176) target = $region12
      $region11: #{tpu_custom_call.1} parent=5 // pred_region
        %s180 = ssub.s32 %s18, 1
      $region12: #{tpu_custom_call.1} parent=5 // pred_fallthru
        _
      %p181 = scmp.lt.s32.totalorder %s18, 8
      // Predicated region
      $region13: #{tpu_custom_call.1} parent=5 // pred_check
        %p182 = pneg %p181
      $region14: #{tpu_custom_call.1} parent=5 // pred_check_branch
        %184 = sbr.rel (%p182) target = $region16
      $region15: #{tpu_custom_call.1} parent=5 // pred_region
        // Predicated region
        $region17: #{tpu_custom_call.1} parent=15 // pred_check
          %p185 = pneg %p68
        $region18: #{tpu_custom_call.1} parent=15 // pred_check_branch
          %187 = sbr.rel (%p185) target = $region20
        $region19: #{tpu_custom_call.1} parent=15 // pred_region
          %s188 = sand.u32 %s58, 1
          %s189 = scalar_lea.sflag [#allocation5], %s188
          %s190 = sand.u32 %s58, 1
          %s191 = smul.addr %s190, 8
          %s192 = scalar_lea.vmem [#allocation4], %s191
          %s194 = ssub.s32 128, 128
          %195 = vsyncadd %s189, %s194
          %s196 = sadd.s32 %s27, %s26
          %s197 = smul.addr %s25, 2
          %s198 = sadd.s32 %s196, %s197
          %s199 = smul.addr %s198, 128
          %s200 = scalar_lea.hbm %s0, %s199
          %s202 = sshll.u32 %s192, 4
          %s203 = int_to_ptr.vmem [resolvable:$true] %s202
          %205 = dma.hbm_to_vmem [thread:$0]  %s200, 128, %s203, %s189
        $region20: #{tpu_custom_call.1} parent=15 // pred_fallthru
          _
        // Predicated region
        $region21: #{tpu_custom_call.1} parent=15 // pred_check
          %p206 = pneg %p98
        $region22: #{tpu_custom_call.1} parent=15 // pred_check_branch
          %208 = sbr.rel (%p206) target = $region24
        $region23: #{tpu_custom_call.1} parent=15 // pred_region
          %s209 = sand.u32 %s18, 1
          %s210 = scalar_lea.sflag [#allocation8], %s209
          %s211 = sand.u32 %s88, 1
          %s212 = smul.addr %s211, 8
          %s213 = scalar_lea.vmem [#allocation7], %s212
          %s215 = ssub.s32 128, 128
          %216 = vsyncadd %s210, %s215
          %s217 = sadd.s32 %s27, %s28
          %s218 = smul.addr %s25, 2
          %s219 = sadd.s32 %s217, %s218
          %s220 = smul.addr %s219, 128
          %s221 = scalar_lea.hbm %s1, %s220
          %s223 = sshll.u32 %s213, 4
          %s224 = int_to_ptr.vmem [resolvable:$true] %s223
          %226 = dma.hbm_to_vmem [thread:$0]  %s221, 128, %s224, %s210
        $region24: #{tpu_custom_call.1} parent=15 // pred_fallthru
          _
        // Predicated region
        $region25: #{tpu_custom_call.1} parent=15 // pred_check
          %p227 = pneg %p130
        $region26: #{tpu_custom_call.1} parent=15 // pred_check_branch
          %229 = sbr.rel (%p227) target = $region28
        $region27: #{tpu_custom_call.1} parent=15 // pred_region
          %s230 = sand.u32 %s18, 1
          %s231 = scalar_lea.sflag [#allocation8], %s230
          %s232 = sand.u32 %s120, 1
          %s233 = smul.addr %s232, 64
          %s234 = scalar_lea.vmem [#allocation9], %s233
          %s235 = smul.u32 8, %s26
          %s237 = ssub.s32 1024, 1024
          %238 = vsyncadd %s231, %s237
          %s239 = sadd.s32 %s27, %s28
          %s240 = smul.addr %s235, 2
          %s241 = sadd.s32 %s239, %s240
          %s242 = smul.addr %s25, 32
          %s243 = sadd.s32 %s241, %s242
          %s244 = smul.addr %s243, 128
          %s245 = scalar_lea.hbm %s2, %s244
          %s246 = sshll.u32 %s234, 4
          %s247 = int_to_ptr.vmem [resolvable:$true] %s246
          %252 = dma.hbm_to_vmem [thread:$0]  %s245, 1024, %s247, %s231, 256, 128, 8
        $region28: #{tpu_custom_call.1} parent=15 // pred_fallthru
          _
      $region16: #{tpu_custom_call.1} parent=5 // pred_fallthru
        _
      %p253 = scmp.le.s32.totalorder 1, %s18
      %p254 = scmp.lt.s32.totalorder %s18, 9
      %p255 = pnand %p253, %p254
      %p256 = pneg %p255
      // Predicated region
      $region29: #{tpu_custom_call.1} parent=5 // pred_check
        _
      $region30: #{tpu_custom_call.1} parent=5 // pred_check_branch
        %258 = sbr.rel (%p255) target = $region32
      $region31: #{tpu_custom_call.1} parent=5 // pred_region
        %s259 = ssub.s32 %s18, 1
        %s260 = sand.u32 %s61, 1
        %s261 = scalar_lea.sflag [#allocation5], %s260
        %s262 = sand.u32 %s61, 1
        %s263 = smul.addr %s262, 8
        %s264 = scalar_lea.vmem [#allocation4], %s263
        // Predicated region
        $region33: #{tpu_custom_call.1} parent=31 // pred_check
          %p265 = pneg %p74
        $region34: #{tpu_custom_call.1} parent=31 // pred_check_branch
          %267 = sbr.rel (%p265) target = $region36
        $region35: #{tpu_custom_call.1} parent=31 // pred_region
          %268 = dma.done %s261, 128
        $region36: #{tpu_custom_call.1} parent=31 // pred_fallthru
          _
        %s269 = sand.u32 %s23, 1
        %s270 = scalar_lea.sflag [#allocation8], %s269
        %s271 = sand.u32 %s91, 1
        %s272 = smul.addr %s271, 8
        %s273 = scalar_lea.vmem [#allocation7], %s272
        // Predicated region
        $region37: #{tpu_custom_call.1} parent=31 // pred_check
          %p274 = pneg %p104
        $region38: #{tpu_custom_call.1} parent=31 // pred_check_branch
          %276 = sbr.rel (%p274) target = $region40
        $region39: #{tpu_custom_call.1} parent=31 // pred_region
          %277 = dma.done %s270, 128
        $region40: #{tpu_custom_call.1} parent=31 // pred_fallthru
          _
        %s278 = sand.u32 %s23, 1
        %s279 = scalar_lea.sflag [#allocation8], %s278
        %s280 = sand.u32 %s123, 1
        %s281 = smul.addr %s280, 64
        %s282 = scalar_lea.vmem [#allocation9], %s281
        // Predicated region
        $region41: #{tpu_custom_call.1} parent=31 // pred_check
          %p283 = pneg %p136
        $region42: #{tpu_custom_call.1} parent=31 // pred_check_branch
          %285 = sbr.rel (%p283) target = $region44
        $region43: #{tpu_custom_call.1} parent=31 // pred_region
          %286 = dma.done %s279, 1024
        $region44: #{tpu_custom_call.1} parent=31 // pred_fallthru
          _
        %s287 = sand.u32 %s61, 1
        %s288 = scalar_lea.sflag [#allocation5], %s287
        %s289 = sand.u32 %s61, 1
        %s290 = smul.addr %s289, 8
        %s291 = scalar_lea.vmem [#allocation4], %s290
        %p292 = pneg %p74
        %p293 = pneg %p71
        %s294 = sand.u32 %s23, 1
        %s295 = scalar_lea.sflag [#allocation8], %s294
        %s296 = sand.u32 %s91, 1
        %s297 = smul.addr %s296, 8
        %s298 = scalar_lea.vmem [#allocation7], %s297
        %p299 = pneg %p104
        %p300 = pneg %p101
        %s301 = sand.u32 %s23, 1
        %s302 = scalar_lea.sflag [#allocation8], %s301
        %s303 = sand.u32 %s123, 1
        %s304 = smul.addr %s303, 64
        %s305 = scalar_lea.vmem [#allocation9], %s304
        %p306 = pneg %p136
        %p307 = pneg %p133
        %p308 = pneg %p166
        %p309 = pneg %p163
        %s310 = sand.u32 %s153, 1
        %s311 = scalar_lea.sflag [#allocation6], %s310
        %s312 = sand.u32 %s153, 1
        %s313 = smul.addr %s312, 8
        %s314 = scalar_lea.vmem [#allocation10], %s313
        %s315 = smul.u32 8, %s30
        %p316 = scmp.eq.s32.totalorder %s32, 0
        // Predicated region
        $region45: #{tpu_custom_call.1} parent=31 // pred_check
          %p317 = pneg %p316
        $region46: #{tpu_custom_call.1} parent=31 // pred_check_branch
          %319 = sbr.rel (%p317) target = $region48
        $region47: #{tpu_custom_call.1} parent=31 // pred_region
          %vm320 = vcmask 261120
          %321 = vst.msk [vmem:[#allocation2] sm:$0xff] %vm320, 0.0
          %322 = vst.msk [vmem:[#allocation3] sm:$0xff] %vm320, 0.0
        $region48: #{tpu_custom_call.1} parent=31 // pred_fallthru
          _
        %v323 = vld [vmem:[%s282] sm:$0xff]
        %v324 = vld [vmem:[%s282 + $0x8] sm:$0xff]
        %v325 = vld [vmem:[%s282 + $0x10] sm:$0xff]
        %v326 = vld [vmem:[%s282 + $0x18] sm:$0xff]
        %v327 = vld [vmem:[%s282 + $0x20] sm:$0xff]
        %v328 = vld [vmem:[%s282 + $0x28] sm:$0xff]
        %v329 = vld [vmem:[%s282 + $0x30] sm:$0xff]
        %v330 = vld [vmem:[%s282 + $0x38] sm:$0xff]
        %v331 = vld [vmem:[%s273] sm:$0xff]
        %v332 = vld [vmem:[#allocation2] sm:$0xff]
        %v333 = vmul.f32 %v323, %v331
        %v334 = vmul.f32 %v324, %v331
        %v335 = vmul.f32 %v325, %v331
        %v336 = vmul.f32 %v326, %v331
        %v337 = vmul.f32 %v327, %v331
        %v338 = vmul.f32 %v328, %v331
        %v339 = vmul.f32 %v329, %v331
        %v340 = vmul.f32 %v330, %v331
        %vm341 = vcmask 261120
        %v342 = vsel %vm341, %v333, 0.0
        %v343 = vrot.slane %v342, 4
        %v344 = vadd.f32 %v342, %v343
        %v345 = vrot.slane %v344, 2
        %v346 = vadd.f32 %v344, %v345
        %v347 = vrot.slane %v346, 1
        %v348 = vadd.f32 %v346, %v347
        %v349 = vsel %vm341, %v334, 0.0
        %v350 = vrot.slane %v349, 4
        %v351 = vadd.f32 %v349, %v350
        %v352 = vrot.slane %v351, 2
        %v353 = vadd.f32 %v351, %v352
        %v354 = vrot.slane %v353, 1
        %v355 = vadd.f32 %v353, %v354
        %v356 = vsel %vm341, %v335, 0.0
        %v357 = vrot.slane %v356, 4
        %v358 = vadd.f32 %v356, %v357
        %v359 = vrot.slane %v358, 2
        %v360 = vadd.f32 %v358, %v359
        %v361 = vrot.slane %v360, 1
        %v362 = vadd.f32 %v360, %v361
        %v363 = vsel %vm341, %v336, 0.0
        %v364 = vrot.slane %v363, 4
        %v365 = vadd.f32 %v363, %v364
        %v366 = vrot.slane %v365, 2
        %v367 = vadd.f32 %v365, %v366
        %v368 = vrot.slane %v367, 1
        %v369 = vadd.f32 %v367, %v368
        %v370 = vsel %vm341, %v337, 0.0
        %v371 = vrot.slane %v370, 4
        %v372 = vadd.f32 %v370, %v371
        %v373 = vrot.slane %v372, 2
        %v374 = vadd.f32 %v372, %v373
        %v375 = vrot.slane %v374, 1
        %v376 = vadd.f32 %v374, %v375
        %v377 = vsel %vm341, %v338, 0.0
        %v378 = vrot.slane %v377, 4
        %v379 = vadd.f32 %v377, %v378
        %v380 = vrot.slane %v379, 2
        %v381 = vadd.f32 %v379, %v380
        %v382 = vrot.slane %v381, 1
        %v383 = vadd.f32 %v381, %v382
        %v384 = vsel %vm341, %v339, 0.0
        %v385 = vrot.slane %v384, 4
        %v386 = vadd.f32 %v384, %v385
        %v387 = vrot.slane %v386, 2
        %v388 = vadd.f32 %v386, %v387
        %v389 = vrot.slane %v388, 1
        %v390 = vadd.f32 %v388, %v389
        %v391 = vsel %vm341, %v340, 0.0
        %v392 = vrot.slane %v391, 4
        %v393 = vadd.f32 %v391, %v392
        %v394 = vrot.slane %v393, 2
        %v395 = vadd.f32 %v393, %v394
        %v396 = vrot.slane %v395, 1
        %v397 = vadd.f32 %v395, %v396
        %vm406 = vcmask 1041409
        %v407 = vsel %vm406, %v355, %v348
        %vm408 = vcmask 1042434
        %v409 = vsel %vm408, %v362, %v407
        %vm410 = vcmask 1043459
        %v411 = vsel %vm410, %v369, %v409
        %vm412 = vcmask 1044484
        %v413 = vsel %vm412, %v376, %v411
        %vm414 = vcmask 1045509
        %v415 = vsel %vm414, %v383, %v413
        %vm416 = vcmask 1046534
        %v417 = vsel %vm416, %v390, %v415
        %vm418 = vcmask 1047559
        %v419 = vsel %vm418, %v397, %v417
        %v421 = vadd.f32 %v332, %v419
        %422 = vst.msk [vmem:[#allocation2] sm:$0xff] %vm341, %v421
        %v423 = vld [vmem:[#allocation3] sm:$0xff]
        %v424 = vsel %vm341, %v323, 0.0
        %v425 = vrot.slane %v424, 4
        %v426 = vadd.f32 %v424, %v425
        %v427 = vrot.slane %v426, 2
        %v428 = vadd.f32 %v426, %v427
        %v429 = vrot.slane %v428, 1
        %v430 = vadd.f32 %v428, %v429
        %v431 = vsel %vm341, %v324, 0.0
        %v432 = vrot.slane %v431, 4
        %v433 = vadd.f32 %v431, %v432
        %v434 = vrot.slane %v433, 2
        %v435 = vadd.f32 %v433, %v434
        %v436 = vrot.slane %v435, 1
        %v437 = vadd.f32 %v435, %v436
        %v438 = vsel %vm341, %v325, 0.0
        %v439 = vrot.slane %v438, 4
        %v440 = vadd.f32 %v438, %v439
        %v441 = vrot.slane %v440, 2
        %v442 = vadd.f32 %v440, %v441
        %v443 = vrot.slane %v442, 1
        %v444 = vadd.f32 %v442, %v443
        %v445 = vsel %vm341, %v326, 0.0
        %v446 = vrot.slane %v445, 4
        %v447 = vadd.f32 %v445, %v446
        %v448 = vrot.slane %v447, 2
        %v449 = vadd.f32 %v447, %v448
        %v450 = vrot.slane %v449, 1
        %v451 = vadd.f32 %v449, %v450
        %v452 = vsel %vm341, %v327, 0.0
        %v453 = vrot.slane %v452, 4
        %v454 = vadd.f32 %v452, %v453
        %v455 = vrot.slane %v454, 2
        %v456 = vadd.f32 %v454, %v455
        %v457 = vrot.slane %v456, 1
        %v458 = vadd.f32 %v456, %v457
        %v459 = vsel %vm341, %v328, 0.0
        %v460 = vrot.slane %v459, 4
        %v461 = vadd.f32 %v459, %v460
        %v462 = vrot.slane %v461, 2
        %v463 = vadd.f32 %v461, %v462
        %v464 = vrot.slane %v463, 1
        %v465 = vadd.f32 %v463, %v464
        %v466 = vsel %vm341, %v329, 0.0
        %v467 = vrot.slane %v466, 4
        %v468 = vadd.f32 %v466, %v467
        %v469 = vrot.slane %v468, 2
        %v470 = vadd.f32 %v468, %v469
        %v471 = vrot.slane %v470, 1
        %v472 = vadd.f32 %v470, %v471
        %v473 = vsel %vm341, %v330, 0.0
        %v474 = vrot.slane %v473, 4
        %v475 = vadd.f32 %v473, %v474
        %v476 = vrot.slane %v475, 2
        %v477 = vadd.f32 %v475, %v476
        %v478 = vrot.slane %v477, 1
        %v479 = vadd.f32 %v477, %v478
        %v488 = vsel %vm406, %v437, %v430
        %v489 = vsel %vm408, %v444, %v488
        %v490 = vsel %vm410, %v451, %v489
        %v491 = vsel %vm412, %v458, %v490
        %v492 = vsel %vm414, %v465, %v491
        %v493 = vsel %vm416, %v472, %v492
        %v494 = vsel %vm418, %v479, %v493
        %v496 = vadd.f32 %v423, %v494
        %497 = vst.msk [vmem:[#allocation3] sm:$0xff] %vm341, %v496
        %p498 = scmp.eq.s32.totalorder %s32, 1
        // Predicated region
        $region49: #{tpu_custom_call.1} parent=31 // pred_check
          %p499 = pneg %p498
        $region50: #{tpu_custom_call.1} parent=31 // pred_check_branch
          %501 = sbr.rel (%p499) target = $region52
        $region51: #{tpu_custom_call.1} parent=31 // pred_region
          %v502 = vld [vmem:[%s264] sm:$0xff]
          %v503 = vld [vmem:[#allocation2] sm:$0xff]
          %v504 = vld [vmem:[#allocation3] sm:$0xff]
          %v505 = vadd.f32 %v504, 1e-20
          %v506 = vrcp.pop %v505
          %v507 = vmul.f32 %v503, %v506
          %v508 = vadd.f32 %v502, %v507
          %509 = vst.msk [vmem:[%s314] sm:$0xff] %vm341, %v508
        $region52: #{tpu_custom_call.1} parent=31 // pred_fallthru
          _
        %s510 = sand.u32 %s153, 1
        %s511 = scalar_lea.sflag [#allocation6], %s510
        %s512 = sand.u32 %s153, 1
        %s513 = smul.addr %s512, 8
        %s514 = scalar_lea.vmem [#allocation10], %s513
        // Predicated region
        $region53: #{tpu_custom_call.1} parent=31 // pred_check
          %p515 = pneg %p163
        $region54: #{tpu_custom_call.1} parent=31 // pred_check_branch
          %517 = sbr.rel (%p515) target = $region56
        $region55: #{tpu_custom_call.1} parent=31 // pred_region
          %s519 = ssub.s32 128, 128
          %520 = vsyncadd %s511, %s519
          %s521 = sadd.s32 %s31, %s30
          %s522 = smul.addr %s29, 2
          %s523 = sadd.s32 %s521, %s522
          %s524 = smul.addr %s523, 128
          %s525 = scalar_lea.hbm %s3, %s524
          %s527 = sshll.u32 %s514, 4
          %s528 = int_to_ptr.vmem [resolvable:$true] %s527
          %530 = dma.vmem_to_hbm [thread:$0]  %s528, 128, %s525, %s511
        $region56: #{tpu_custom_call.1} parent=31 // pred_fallthru
          _
      $region32: #{tpu_custom_call.1} parent=5 // pred_fallthru
        _
      %p531 = scmp.le.s32.totalorder 2, %s18
      // Predicated region
      $region57: #{tpu_custom_call.1} parent=5 // pred_check
        %p532 = pneg %p531
      $region58: #{tpu_custom_call.1} parent=5 // pred_check_branch
        %534 = sbr.rel (%p532) target = $region60
      $region59: #{tpu_custom_call.1} parent=5 // pred_region
        %s535 = ssub.s32 %s18, 2
        // Predicated region
        $region61: #{tpu_custom_call.1} parent=59 // pred_check
          %p536 = pneg %p169
        $region62: #{tpu_custom_call.1} parent=59 // pred_check_branch
          %538 = sbr.rel (%p536) target = $region64
        $region63: #{tpu_custom_call.1} parent=59 // pred_region
          %s539 = sand.u32 %s154, 1
          %s540 = scalar_lea.sflag [#allocation6], %s539
          %s541 = sand.u32 %s154, 1
          %s542 = smul.addr %s541, 8
          %s543 = scalar_lea.vmem [#allocation10], %s542
          %544 = dma.done %s540, 128
        $region64: #{tpu_custom_call.1} parent=59 // pred_fallthru
          _
      $region60: #{tpu_custom_call.1} parent=5 // pred_fallthru
        _
    $region6: #{tpu_custom_call.1} parent=1 // loop_footer
      %s22 = sadd.s32 1, %s18
    $region7: #{tpu_custom_call.1} parent=1 // loop_footer_branch
      %17 = sbr.rel target = $region3
    $region8: #{tpu_custom_call.1} parent=1 // loop_exit
      _
    %545 = vsyncpa [#allocation5], 1
    %s546 = scalar_lea.sflag [#allocation5], 1
    %547 = vsyncpa %s546, 1
    %548 = vsyncpa [#allocation8], 1
    %s549 = scalar_lea.sflag [#allocation8], 1
    %550 = vsyncpa %s549, 1
    %551 = vsyncpa [#allocation6], 1
    %s552 = scalar_lea.sflag [#allocation6], 1
    %553 = vsyncpa %s552, 1

</llo_original>
